<compile_context>
chip_gen: v5e
topology: v5e:2x2
jax: 0.10.0
libtpu: 0.0.40
codegen_flags: <defaults>
</compile_context>

<pallas_src>
import functools

import jax
import jax.numpy as jnp
from jax.experimental import pallas as pl
from jax.experimental.pallas import tpu as pltpu


def _planar_flow_kernel(z_ref, lam_ref, fz_ref, ld_ref, *, D):
    z = z_ref[...]                          # (tile_b, D)
    lam = lam_ref[...]                      # (tile_b, 1 + 2D)

    # Static lane slices of the packed params (in vregs, no extra HBM pass).
    b = lam[:, 0:1]                         # (tile_b, 1)
    w = lam[:, 1:1 + D]                     # (tile_b, D)
    u = lam[:, 1 + D:1 + 2 * D]             # (tile_b, D)

    # z . w per row (VPU mul + XLU lane reduce) + b, then tanh (EUP).
    transf = jnp.tanh(jnp.sum(z * w, axis=-1, keepdims=True) + b)   # (tile_b, 1)

    # f_z = z + u * transf
    fz_ref[...] = z + u * transf

    # logdet = log(|1 + (1 - transf^2) * sum_d w*u|)   (scalar factored out of the
    # lane reduction: one fewer (tile_b, D) multiply than (1-t^2)*w*u summed).
    wu = jnp.sum(w * u, axis=-1, keepdims=True)                     # (tile_b, 1)
    ld_ref[...] = jnp.log(jnp.abs(1.0 + (1.0 - transf * transf) * wu))


def _ceil_to(x, m):
    return ((x + m - 1) // m) * m


def _vmem_capacity_bytes():
    """Physical per-core VMEM; falls back to the smallest current generation (v7x)."""
    cap = 64 * 1024 * 1024
    try:
        info = pltpu.get_tpu_info()
        cap = int(getattr(info, "vmem_capacity_bytes", cap)) or cap
    except Exception:
        pass
    return cap


def _pick_tile_b(B, D, block_budget_bytes):
    """Largest batch tile that (a) keeps the double-buffered z/lamda/f_z/logdet
    blocks inside `block_budget_bytes` and (b) leaves >= 2 grid steps for non-tiny
    batches so both v7x TensorCores get work (>= 4 steps for large batches)."""
    lane = 128
    d_pad = _ceil_to(D, lane)                     # z / f_z VMEM lane padding
    p_pad = _ceil_to(1 + 2 * D, lane)             # packed-lamda block
    row_bytes = 4 * (2 * d_pad + p_pad + lane)    # + lane: lane-padded (tile_b, 1) logdet tile
    vmem_rows = max(8, (block_budget_bytes // (2 * row_bytes)) // 8 * 8)  # 2x: double buffering

    if B <= 16:
        return B                                  # block == full array dim: legal, single step
    if B <= 1024:
        target = _ceil_to(pl.cdiv(B, 2), 8)       # 2 balanced tiles -> 1 per v7x TensorCore
    else:
        target = max(512, _ceil_to(pl.cdiv(B, 4), 8))   # >= 4 tiles, >= 512 rows each
    return max(8, min(target, vmem_rows, _ceil_to(B, 8)))


def planar_flow(z, lamda):
    """z: (B, D) f32, lamda: (B, 1 + 2D) f32 -> (f_z (B, D), logdet (B, 1, 1))."""
    B, D = z.shape
    P = 1 + 2 * D
    assert lamda.shape == (B, P), (lamda.shape, (B, P))

    cap = _vmem_capacity_bytes()
    block_budget = (2 * cap) // 5         # <= 40% of physical VMEM for our pipelined blocks
    vmem_limit = (3 * cap) // 4           # scoped limit: 75% of physical (Mosaic scratch headroom)
    tile_b = _pick_tile_b(B, D, block_budget)
    grid = (pl.cdiv(B, tile_b),)

    cost = pl.CostEstimate(
        flops=7 * B * D,
        transcendentals=2 * B,                       # tanh + log per row
        bytes_accessed=4 * (2 * B * D + B * P + B),  # z + f_z + lamda + logdet
    )

    f_z, logdet = pl.pallas_call(
        functools.partial(_planar_flow_kernel, D=D),
        out_shape=(
            jax.ShapeDtypeStruct((B, D), z.dtype),
            jax.ShapeDtypeStruct((B, 1), z.dtype),
        ),
        grid=grid,
        in_specs=[
            pl.BlockSpec((tile_b, D), lambda i: (i, 0)),   # z
            pl.BlockSpec((tile_b, P), lambda i: (i, 0)),   # lamda (packed b|w|u)
        ],
        out_specs=(
            pl.BlockSpec((tile_b, D), lambda i: (i, 0)),   # f_z
            pl.BlockSpec((tile_b, 1), lambda i: (i, 0)),   # logdet column
        ),
        compiler_params=pltpu.CompilerParams(
            dimension_semantics=("parallel",),             # shard batch tiles across TCs (v7x)
            vmem_limit_bytes=vmem_limit,
        ),
        cost_estimate=cost,
    )(z, lamda)

    # PyTorch returns log_abs_det_jacobian with shape (B, 1, 1) (bmm result).
    return f_z, logdet.reshape(B, 1, 1)


def _reference(z, lamda):
    """Pure-JAX reference for correctness checks."""
    D = z.shape[1]
    b = lamda[:, :1]
    w = lamda[:, 1:1 + D]
    u = lamda[:, 1 + D:]
    transf = jnp.tanh(jnp.sum(z * w, axis=-1, keepdims=True) + b)
    f_z = z + u * transf
    psi = (1.0 - transf ** 2) * w
    logdet = jnp.log(jnp.abs(1.0 + jnp.sum(psi * u, axis=-1, keepdims=True)))
    return f_z, logdet.reshape(-1, 1, 1)


if __name__ == "__main__":
    key = jax.random.PRNGKey(0)

    # (B=8, D=32): single-tile path.  (B=40, D=48): multi-tile path with a partial
    # last block (exercises the new core-aware tiling + writeback masking).
    for (B, D) in ((8, 32), (40, 48)):
        kz, kl, key = jax.random.split(key, 3)
        z = jax.random.normal(kz, (B, D), dtype=jnp.float32)
        lamda = 0.1 * jax.random.normal(kl, (B, 1 + 2 * D), dtype=jnp.float32)

        f_z, logdet = planar_flow(z, lamda)
        jax.block_until_ready((f_z, logdet))

        f_exp, ld_exp = _reference(z, lamda)
        assert f_z.shape == (B, D) and logdet.shape == (B, 1, 1)
        assert jnp.allclose(f_z, f_exp, atol=1e-5, rtol=1e-5)
        assert jnp.allclose(logdet, ld_exp, atol=1e-5, rtol=1e-5)

    print("KERNEL_OK")
</pallas_src>

<mosaic_0001>
module attributes {stable_mosaic.version = 11 : i64} {
  func.func @_planar_flow_kernel(%arg0: i32, %arg1: memref<8x32xf32, #tpu.memory_space<vmem>>, %arg2: memref<8x65xf32, #tpu.memory_space<vmem>>, %arg3: memref<8x32xf32, #tpu.memory_space<vmem>>, %arg4: memref<8x1xf32, #tpu.memory_space<vmem>>) attributes {dimension_semantics = [#tpu.dimension_semantics<parallel>], iteration_bounds = array<i64: 1>, scalar_prefetch = 0 : i64, scratch_operands = 0 : i64, tpu.core_type = #tpu.core_type<tc>, window_params = [{transform_indices = @transform_0, window_bounds = array<i64: 8, 32>}, {transform_indices = @transform_1, window_bounds = array<i64: 8, 65>}, {transform_indices = @transform_2, window_bounds = array<i64: 8, 32>}, {transform_indices = @transform_3, window_bounds = array<i64: 8, 1>}]} {
    %c0 = arith.constant 0 : index
    %c0_0 = arith.constant 0 : index
    %0 = vector.load %arg1[%c0, %c0_0] : memref<8x32xf32, #tpu.memory_space<vmem>>, vector<8x32xf32>
    %c0_1 = arith.constant 0 : index
    %c0_2 = arith.constant 0 : index
    %1 = vector.load %arg2[%c0_1, %c0_2] : memref<8x65xf32, #tpu.memory_space<vmem>>, vector<8x65xf32>
    %2 = vector.extract_strided_slice %1 {offsets = [0, 0], sizes = [8, 1], strides = [1, 1]} : vector<8x65xf32> to vector<8x1xf32>
    %3 = vector.extract_strided_slice %1 {offsets = [0, 1], sizes = [8, 32], strides = [1, 1]} : vector<8x65xf32> to vector<8x32xf32>
    %4 = vector.extract_strided_slice %1 {offsets = [0, 33], sizes = [8, 32], strides = [1, 1]} : vector<8x65xf32> to vector<8x32xf32>
    %5 = arith.mulf %0, %3 : vector<8x32xf32>
    %cst = arith.constant dense<0.000000e+00> : vector<8xf32>
    %6 = vector.multi_reduction <add>, %5, %cst [1] : vector<8x32xf32> to vector<8xf32>
    %7 = vector.shape_cast %6 : vector<8xf32> to vector<8x1xf32>
    %8 = arith.addf %7, %2 : vector<8x1xf32>
    %9 = math.tanh %8 : vector<8x1xf32>
    %10 = vector.broadcast %9 : vector<8x1xf32> to vector<8x32xf32>
    %11 = arith.mulf %4, %10 : vector<8x32xf32>
    %12 = arith.addf %0, %11 : vector<8x32xf32>
    %c0_3 = arith.constant 0 : index
    %c0_4 = arith.constant 0 : index
    %13 = vector.load %arg3[%c0_3, %c0_4] : memref<8x32xf32, #tpu.memory_space<vmem>>, vector<8x32xf32>
    tpu.vector_store %arg3[%c0_3, %c0_4], %12 {strides = array<i32>} : memref<8x32xf32, #tpu.memory_space<vmem>>, vector<8x32xf32>,
    %14 = arith.mulf %3, %4 : vector<8x32xf32>
    %cst_5 = arith.constant dense<0.000000e+00> : vector<8xf32>
    %15 = vector.multi_reduction <add>, %14, %cst_5 [1] : vector<8x32xf32> to vector<8xf32>
    %16 = vector.shape_cast %15 : vector<8xf32> to vector<8x1xf32>
    %17 = arith.mulf %9, %9 : vector<8x1xf32>
    %cst_6 = arith.constant 1.000000e+00 : f32
    %18 = vector.broadcast %cst_6 : f32 to vector<8x1xf32>
    %19 = arith.subf %18, %17 : vector<8x1xf32>
    %20 = arith.mulf %19, %16 : vector<8x1xf32>
    %cst_7 = arith.constant 1.000000e+00 : f32
    %21 = vector.broadcast %cst_7 : f32 to vector<8x1xf32>
    %22 = arith.addf %21, %20 : vector<8x1xf32>
    %23 = math.absf %22 : vector<8x1xf32>
    %24 = math.log %23 : vector<8x1xf32>
    %c0_8 = arith.constant 0 : index
    %c0_9 = arith.constant 0 : index
    %25 = vector.load %arg4[%c0_8, %c0_9] : memref<8x1xf32, #tpu.memory_space<vmem>>, vector<8x1xf32>
    tpu.vector_store %arg4[%c0_8, %c0_9], %24 {strides = array<i32>} : memref<8x1xf32, #tpu.memory_space<vmem>>, vector<8x1xf32>,
    return
  }
  func.func @transform_0(%arg0: i32) -> (i32, i32) {
    %c0_i32 = arith.constant 0 : i32
    %c0_i32_0 = arith.constant 0 : i32
    return %arg0, %c0_i32 : i32, i32
  }
  func.func @transform_1(%arg0: i32) -> (i32, i32) {
    %c0_i32 = arith.constant 0 : i32
    %c0_i32_0 = arith.constant 0 : i32
    return %arg0, %c0_i32 : i32, i32
  }
  func.func @transform_2(%arg0: i32) -> (i32, i32) {
    %c0_i32 = arith.constant 0 : i32
    %c0_i32_0 = arith.constant 0 : i32
    return %arg0, %c0_i32 : i32, i32
  }
  func.func @transform_3(%arg0: i32) -> (i32, i32) {
    %c0_i32 = arith.constant 0 : i32
    %c0_i32_0 = arith.constant 0 : i32
    return %arg0, %c0_i32 : i32, i32
  }
}

</mosaic_0001>

<llo_original>
// kernel: tpu_custom_call.1
$region0: #{tpu_custom_call.1}
  #allocation0 [shape = 'u32[]', space=smem, size = 0x4, offset = 0x4, fixed_abs, tag = 'smem constant byte address 0x4 - core index']
  #allocation1 [shape = 'u32[72,128]{1,0:T(1,128)}', space=vmem, size = 0x9000, scoped, tag = 'internal scratch']
  %s0 = inlined_call_operand.hbm [shape: f32[8,32], index: 0, kind: input, shape index: {}]
  %s1 = inlined_call_operand.hbm [shape: f32[8,65], index: 1, kind: input, shape index: {}]
  %s2 = inlined_call_operand.hbm [shape: f32[8,32], index: 2, kind: output, shape index: {0}]
  %s3 = inlined_call_operand.vmem [shape: f32[8,1], index: 3, kind: output, shape index: {1}]
  %4 = xla_tuple %s2, %s3
  %s5 = sld [smem:[#allocation0]]
  $region34: #{tpu_custom_call.1} parent=0
    _
  %s7 = ssub.s32 1, %s5
  %s8 = scalar_select 0, %s7, %s5
  $region1: #{tpu_custom_call.1} parent=0
    #allocation2 [shape = 'u8[4096]{0}', space=vmem, size = 0x1000, scoped, tag = 'input window, operand 0, single buffered']
    #allocation3 [shape = 's32[1]{0}', space=sflag, size = 0x4, scoped, tag = 'scoped memory for tpu_custom_call.1']
    #allocation4 [shape = 's32[1]{0}', space=sflag, size = 0x4, scoped, tag = 'scoped memory for tpu_custom_call.1']
    #allocation5 [shape = 'u8[4096]{0}', space=vmem, size = 0x1000, scoped, tag = 'input window, operand 1, single buffered']
    #allocation6 [shape = 's32[1]{0}', space=sflag, size = 0x4, scoped, tag = 'scoped memory for tpu_custom_call.1']
    #allocation7 [shape = 'u8[4096]{0}', space=vmem, size = 0x1000, scoped, tag = 'output window, operand 0, single buffered']
    %9 = vsyncpa [#allocation3], 0
    %10 = vsyncpa [#allocation6], 0
    %11 = vsyncpa [#allocation4], 0
    // Predicated region
    $region2: #{tpu_custom_call.1} parent=1 // pred_check
      _
    $region3: #{tpu_custom_call.1} parent=1 // pred_check_branch
      %13 = sbr.rel (0) target = $region5
    $region4: #{tpu_custom_call.1} parent=1 // pred_region
      %15 = vsyncadd [#allocation3], 0
      %s17 = sshll.u32 %s0, 4
      %s18 = int_to_ptr.hbm [resolvable:$true] %s17
      %s19 = sshll.u32 [#allocation2], 4
      %s20 = int_to_ptr.vmem [resolvable:$true] %s19
      %22 = dma.hbm_to_vmem [thread:$0]  %s18, 128, %s20, [#allocation3]
    $region5: #{tpu_custom_call.1} parent=1 // pred_fallthru
      _
    // Predicated region
    $region6: #{tpu_custom_call.1} parent=1 // pred_check
      _
    $region7: #{tpu_custom_call.1} parent=1 // pred_check_branch
      %24 = sbr.rel (0) target = $region9
    $region8: #{tpu_custom_call.1} parent=1 // pred_region
      %26 = vsyncadd [#allocation6], 0
      %s28 = sshll.u32 %s1, 4
      %s29 = int_to_ptr.hbm [resolvable:$true] %s28
      %s30 = sshll.u32 [#allocation5], 4
      %s31 = int_to_ptr.vmem [resolvable:$true] %s30
      %33 = dma.hbm_to_vmem [thread:$0]  %s29, 128, %s31, [#allocation6]
    $region9: #{tpu_custom_call.1} parent=1 // pred_fallthru
      _
    // Predicated region
    $region10: #{tpu_custom_call.1} parent=1 // pred_check
      _
    $region11: #{tpu_custom_call.1} parent=1 // pred_check_branch
      %35 = sbr.rel (0) target = $region13
    $region12: #{tpu_custom_call.1} parent=1 // pred_region
      %37 = dma.done [#allocation3], 128
    $region13: #{tpu_custom_call.1} parent=1 // pred_fallthru
      _
    // Predicated region
    $region14: #{tpu_custom_call.1} parent=1 // pred_check
      _
    $region15: #{tpu_custom_call.1} parent=1 // pred_check_branch
      %39 = sbr.rel (0) target = $region17
    $region16: #{tpu_custom_call.1} parent=1 // pred_region
      %41 = dma.done [#allocation6], 128
    $region17: #{tpu_custom_call.1} parent=1 // pred_fallthru
      _
    %v42 = vld [vmem:[#allocation2] sm:$0xff]
    %v43 = vld [vmem:[#allocation5] sm:$0xff]
    %45 = vrot.lane.b32.xlu0 %v43, 127
    %v46 = vpop.permute.xlu0 %45
    %v48 = vmul.f32 %v42, %v46
    %vm49 = vcmask 261120
    %v50 = vsel %vm49, %v48, 0.0
    %51 = vadd.xlane.f32.xlu0 %v50
    %v52 = vpop.xlane.xlu0 %51
    %v53 = vadd.f32 %v52, %v43
    %v54 = vtanh.pop %v53
    %56 = vset.pattern.permute.xlu0 0
    %57 = vperm.xlu0 %56, %v54
    %v58 = vpop.permute.xlu0 %57
    %v60 = vmul.f32 %v43, %v58
    %62 = vrot.lane.b32.xlu0 %v60, 95
    %v63 = vpop.permute.xlu0 %62
    %v65 = vadd.f32 %v42, %v63
    %66 = vst.msk [vmem:[#allocation7] sm:$0xff] %vm49, %v65
    %67 = vrot.lane.b32.xlu0 %v43, 96
    %v68 = vpop.permute.xlu0 %67
    %v70 = vmul.f32 %v43, %v68
    %72 = vrot.lane.b32.xlu0 %v70, 127
    %v73 = vpop.permute.xlu0 %72
    %v75 = vsel %vm49, %v73, 0.0
    %76 = vadd.xlane.f32.xlu0 %v75
    %v77 = vpop.xlane.xlu0 %76
    %v78 = vmul.f32 %v54, %v54
    %v79 = vsub.f32 1.0, %v78
    %v80 = vmul.f32 %v79, %v77
    %v81 = vadd.f32 %v80, 1.0
    %v82 = vand.u32 2147483647, %v81
    %v83 = vlog2.pop %v82
    %v84 = vmul.f32 %v83, 0.6931472
    %vm85 = vcmask 7168
    %86 = vst.msk [vmem:[%s3] sm:$0xff] %vm85, %v84
    // Predicated region
    $region18: #{tpu_custom_call.1} parent=1 // pred_check
      _
    $region19: #{tpu_custom_call.1} parent=1 // pred_check_branch
      %88 = sbr.rel (0) target = $region21
    $region20: #{tpu_custom_call.1} parent=1 // pred_region
      %90 = vsyncadd [#allocation4], 0
      %s92 = sshll.u32 [#allocation7], 4
      %s93 = int_to_ptr.vmem [resolvable:$true] %s92
      %s94 = sshll.u32 %s2, 4
      %s95 = int_to_ptr.hbm [resolvable:$true] %s94
      %97 = dma.vmem_to_hbm [thread:$0]  %s93, 128, %s95, [#allocation4]
    $region21: #{tpu_custom_call.1} parent=1 // pred_fallthru
      _
    // Predicated region
    $region22: #{tpu_custom_call.1} parent=1 // pred_check
      _
    $region23: #{tpu_custom_call.1} parent=1 // pred_check_branch
      %99 = sbr.rel (0) target = $region25
    $region24: #{tpu_custom_call.1} parent=1 // pred_region
      _
    $region25: #{tpu_custom_call.1} parent=1 // pred_fallthru
      _
    // Predicated region
    $region26: #{tpu_custom_call.1} parent=1 // pred_check
      _
    $region27: #{tpu_custom_call.1} parent=1 // pred_check_branch
      %101 = sbr.rel (0) target = $region29
    $region28: #{tpu_custom_call.1} parent=1 // pred_region
      %103 = dma.done [#allocation4], 128
    $region29: #{tpu_custom_call.1} parent=1 // pred_fallthru
      _
    // Predicated region
    $region30: #{tpu_custom_call.1} parent=1 // pred_check
      _
    $region31: #{tpu_custom_call.1} parent=1 // pred_check_branch
      %105 = sbr.rel (0) target = $region33
    $region32: #{tpu_custom_call.1} parent=1 // pred_region
      _
    $region33: #{tpu_custom_call.1} parent=1 // pred_fallthru
      _
    %106 = vsyncpa [#allocation3], 1
    %107 = vsyncpa [#allocation6], 1
    %108 = vsyncpa [#allocation4], 1

</llo_original>
